<compile_context>
chip_gen: v7x
topology: tpu7x:2x2x1
jax: 0.10.0
libtpu: 0.0.40
codegen_flags: <defaults>
</compile_context>

<pallas_src>
import jax
import jax.numpy as jnp
from jax import lax
from jax.experimental import pallas as pl
from jax.experimental.pallas import tpu as pltpu


def _round_up(a: int, m: int) -> int:
    return (a + m - 1) // m * m


def _global_sa_kernel(x_ref, batch_ref,
                      w1_ref, b1_ref, w2_ref, b2_ref, w3_ref, b3_ref,
                      out_ref, acc_ref):
    """One N-tile of: per-point MLP + partial segment-sum into resident accumulator.

    x_ref    : [TN, CPp]  bf16   fused [x | pos] features (zero-padded rows/cols)
    batch_ref: [TN, 1]    i32    graph id per point (-1 for padded rows)
    w1       : [CPp,H1p]  bf16 ; w2 [H1p,H2p] bf16 ; w3 [H2p,Fp] bf16
    b1/b2/b3 : [1,H1p]/[1,H2p]/[1,Fp] f32
    out_ref  : [Bp, Fp]   f32    per-split partial sums (written on last step)
    acc_ref  : [Bp, Fp]   f32    VMEM scratch accumulator (persists across the
                                 "arbitrary" grid axis; one per core under the
                                 "parallel" axis)
    """
    step = pl.program_id(1)

    @pl.when(step == 0)
    def _():
        acc_ref[...] = jnp.zeros_like(acc_ref)

    # --- shared MLP: bf16 MXU operands, f32 accumulation, f32 VPU activations ---
    h = jnp.dot(x_ref[...], w1_ref[...],
                preferred_element_type=jnp.float32) + b1_ref[...]
    h = jnp.maximum(h, 0.0)
    h = jnp.dot(h.astype(jnp.bfloat16), w2_ref[...],
                preferred_element_type=jnp.float32) + b2_ref[...]
    h = jnp.maximum(h, 0.0)
    h = jnp.dot(h.astype(jnp.bfloat16), w3_ref[...],
                preferred_element_type=jnp.float32) + b3_ref[...]
    # (last layer plain: no activation, matching torch_geometric MLP plain_last)

    # --- per-tile segment sum via bf16 one-hot matmul (rows with bid==-1 drop) ---
    tn = x_ref.shape[0]
    nb = out_ref.shape[0]
    bid = batch_ref[...]                                          # [TN, 1] i32
    seg = lax.broadcasted_iota(jnp.int32, (tn, nb), 1)            # [TN, Bp]
    onehot = (bid == seg).astype(jnp.bfloat16)                    # exact in bf16
    acc_ref[...] += lax.dot_general(                              # [Bp, Fp] f32 acc
        onehot, h.astype(jnp.bfloat16), (((0,), (0,)), ((), ())),
        preferred_element_type=jnp.float32)

    @pl.when(step == pl.num_programs(1) - 1)
    def _():
        out_ref[...] = acc_ref[...]


def global_sa_module(x, pos, batch, params, num_graphs, *,
                     tile_n=4096, num_splits=2):
    """JAX wrapper around the Pallas kernel.

    x:     [N, C]  float32
    pos:   [N, P]  float32 (P = 3)
    batch: [N]     int32 (values in [0, num_graphs); ids outside are dropped)
    params: dict with w1 [C+P,H1], b1 [1,H1], w2 [H1,H2], b2 [1,H2], w3 [H2,F], b3 [1,F]
    tile_n: points per grid step (sweep 4096-16384 on large clouds)
    num_splits: leading "parallel" grid axis (2 uses both TCs on v7x; correct on 1-TC chips)
    Returns (x_pooled [B, F], pos_out [B, 3], batch_out [B]).
    """
    N, C = x.shape
    P = pos.shape[1]
    H1 = params["w1"].shape[1]
    H2 = params["w2"].shape[1]
    F = params["w3"].shape[1]

    # Padded layout: lane-dense output & hidden activations, sublane-aligned rest.
    B_pad = _round_up(max(num_graphs, 1), 8)
    F_pad = _round_up(F, 128)
    H1_pad = _round_up(H1, 128)
    H2_pad = _round_up(H2, 128)
    CP = C + P
    CP_pad = _round_up(CP, 8)

    # N tiling: leading parallel split, trailing streamed tiles (multiple of 16
    # for bf16 sublane packing); pad N to a multiple of num_splits * tn.
    num_splits = max(int(num_splits), 1)
    tn = _round_up(min(int(tile_n), pl.cdiv(N, num_splits)), 16)
    n_pad = _round_up(N, num_splits * tn)
    tiles_per_split = n_pad // tn // num_splits
    grid = (num_splits, tiles_per_split)
    pad_n = n_pad - N

    # --- streamed input: fused [x | pos], one XLA pass (concat+pad+cast fuse) ---
    xp = jnp.concatenate([x.astype(jnp.float32), pos.astype(jnp.float32)], axis=1)
    xp = jnp.pad(xp, ((0, pad_n), (0, CP_pad - CP))).astype(jnp.bfloat16)
    batch_i = batch.astype(jnp.int32)
    batch_p = jnp.pad(batch_i, (0, pad_n), constant_values=-1).reshape(n_pad, 1)

    # --- resident parameters: bf16 MXU operands, zero-padded lane-dense dims ---
    # (zero padding is exact: padded H columns stay 0 through ReLU and w2/w3 rows)
    w1 = jnp.pad(params["w1"].astype(jnp.float32),
                 ((0, CP_pad - CP), (0, H1_pad - H1))).astype(jnp.bfloat16)
    b1 = jnp.pad(params["b1"].astype(jnp.float32), ((0, 0), (0, H1_pad - H1)))
    w2 = jnp.pad(params["w2"].astype(jnp.float32),
                 ((0, H1_pad - H1), (0, H2_pad - H2))).astype(jnp.bfloat16)
    b2 = jnp.pad(params["b2"].astype(jnp.float32), ((0, 0), (0, H2_pad - H2)))
    w3 = jnp.pad(params["w3"].astype(jnp.float32),
                 ((0, H2_pad - H2), (0, F_pad - F))).astype(jnp.bfloat16)
    b3 = jnp.pad(params["b3"].astype(jnp.float32), ((0, 0), (0, F_pad - F)))

    # --- VMEM budget from the actual per-step working set, generation-aware cap ---
    bytes_stream = tn * (CP_pad * 2 + 4)                           # bf16 fused input + i32 batch
    bytes_act = tn * (H1_pad + H2_pad + F_pad + B_pad) * 4         # f32 activations + one-hot
    bytes_w = (CP_pad * H1_pad + H1_pad * H2_pad + H2_pad * F_pad) * 2 \
        + (H1_pad + H2_pad + F_pad) * 4
    bytes_out = B_pad * F_pad * 4 * 3                              # out block (dbl buf) + acc
    est = 2 * bytes_stream + bytes_act + 2 * bytes_w + bytes_out
    try:
        vmem_cap = int(pltpu.get_tpu_info().vmem_capacity_bytes)   # 64 MiB v7x, 128 MiB v5e/v6e
    except Exception:
        vmem_cap = 64 * 1024 * 1024
    vmem_limit = int(min(max(4 * est, 24 * 1024 * 1024), (vmem_cap * 3) // 4))

    partials = pl.pallas_call(
        _global_sa_kernel,
        out_shape=jax.ShapeDtypeStruct((num_splits * B_pad, F_pad), jnp.float32),
        grid=grid,
        in_specs=[
            pl.BlockSpec((tn, CP_pad),
                         lambda c, i: (c * tiles_per_split + i, 0)),  # fused x|pos (streamed)
            pl.BlockSpec((tn, 1),
                         lambda c, i: (c * tiles_per_split + i, 0)),  # batch ids   (streamed)
            pl.BlockSpec((CP_pad, H1_pad), lambda c, i: (0, 0)),      # w1 (resident)
            pl.BlockSpec((1, H1_pad), lambda c, i: (0, 0)),           # b1
            pl.BlockSpec((H1_pad, H2_pad), lambda c, i: (0, 0)),      # w2
            pl.BlockSpec((1, H2_pad), lambda c, i: (0, 0)),           # b2
            pl.BlockSpec((H2_pad, F_pad), lambda c, i: (0, 0)),       # w3
            pl.BlockSpec((1, F_pad), lambda c, i: (0, 0)),            # b3
        ],
        out_specs=pl.BlockSpec((B_pad, F_pad), lambda c, i: (c, 0)),  # per-split partial sums
        scratch_shapes=[pltpu.VMEM((B_pad, F_pad), jnp.float32)],     # f32 accumulator
        compiler_params=pltpu.CompilerParams(
            dimension_semantics=("parallel", "arbitrary"),            # split N / reduce tiles
            vmem_limit_bytes=vmem_limit,
        ),
    )(xp, batch_p, w1, b1, w2, b2, w3, b3)

    # Tiny combine epilogue: sum per-split partials, divide by counts, slice padding.
    counts = jnp.bincount(batch_i, length=num_graphs).astype(jnp.float32)
    sums = partials.reshape(num_splits, B_pad, F_pad).sum(axis=0)[:num_graphs, :F]
    x_out = sums / jnp.maximum(counts, 1.0)[:, None]

    pos_out = jnp.zeros((num_graphs, 3), dtype=pos.dtype)
    batch_out = jnp.arange(num_graphs, dtype=jnp.int32)
    return x_out, pos_out, batch_out


def make_params(key, c_in, h1, h2, f_out):
    """Deterministic synthetic MLP parameters (Kaiming-ish scale)."""
    k1, k2, k3 = jax.random.split(key, 3)

    def lin(k, ci, co):
        w = jax.random.normal(k, (ci, co), jnp.float32) * (2.0 / ci) ** 0.5
        b = jnp.zeros((1, co), jnp.float32)
        return w, b

    w1, b1 = lin(k1, c_in, h1)
    w2, b2 = lin(k2, h1, h2)
    w3, b3 = lin(k3, h2, f_out)
    return {"w1": w1, "b1": b1, "w2": w2, "b2": b2, "w3": w3, "b3": b3}


if __name__ == "__main__":
    key = jax.random.PRNGKey(0)
    kx, kp, kw = jax.random.split(key, 3)

    # Small shapes: N=64 points, 13 feature channels + 3 pos, MLP 16->32->32->64, B=2 graphs.
    N, C, B = 64, 13, 2
    H1, H2, F_OUT = 32, 32, 64

    x = jax.random.normal(kx, (N, C), jnp.float32)
    pos = jax.random.normal(kp, (N, 3), jnp.float32)
    batch = jnp.repeat(jnp.arange(B, dtype=jnp.int32), N // B)          # [N]

    params = make_params(kw, C + 3, H1, H2, F_OUT)

    # tile_n=16 with num_splits=2 -> grid=(2, 2): exercises both the parallel split
    # (two output partials) and the cross-tile resident accumulator path.
    x_out, pos_out, batch_out = global_sa_module(x, pos, batch, params,
                                                 num_graphs=B, tile_n=16,
                                                 num_splits=2)
    jax.block_until_ready((x_out, pos_out, batch_out))

    # Pure-JAX reference mirroring the kernel's dtypes (bf16 MXU operands, f32 accum).
    bf = jnp.bfloat16
    xin = jnp.concatenate([x, pos], axis=1).astype(bf)
    h = jnp.dot(xin, params["w1"].astype(bf),
                preferred_element_type=jnp.float32) + params["b1"]
    h = jnp.maximum(h, 0.0)
    h = jnp.dot(h.astype(bf), params["w2"].astype(bf),
                preferred_element_type=jnp.float32) + params["b2"]
    h = jnp.maximum(h, 0.0)
    h = jnp.dot(h.astype(bf), params["w3"].astype(bf),
                preferred_element_type=jnp.float32) + params["b3"]
    onehot = (batch[:, None] == jnp.arange(B)[None, :]).astype(bf)
    sums = lax.dot_general(onehot, h.astype(bf), (((0,), (0,)), ((), ())),
                           preferred_element_type=jnp.float32)
    cnt = jnp.maximum(onehot.astype(jnp.float32).sum(0)[:, None], 1.0)
    ref = sums / cnt

    assert x_out.shape == (B, F_OUT) and pos_out.shape == (B, 3) and batch_out.shape == (B,)
    assert bool(jnp.all(pos_out == 0.0))
    assert bool(jnp.all(batch_out == jnp.arange(B)))
    max_err = float(jnp.max(jnp.abs(x_out - ref)))
    assert jnp.allclose(x_out, ref, atol=2e-2, rtol=2e-2), f"max abs err = {max_err}"

    print("KERNEL_OK")
</pallas_src>

<mosaic_0001>
module attributes {stable_mosaic.version = 11 : i64} {
  func.func @_global_sa_kernel(%arg0: i32, %arg1: i32, %arg2: memref<16x16xbf16, #tpu.memory_space<vmem>>, %arg3: memref<16x1xi32, #tpu.memory_space<vmem>>, %arg4: memref<16x128xbf16, #tpu.memory_space<vmem>>, %arg5: memref<1x128xf32, #tpu.memory_space<vmem>>, %arg6: memref<128x128xbf16, #tpu.memory_space<vmem>>, %arg7: memref<1x128xf32, #tpu.memory_space<vmem>>, %arg8: memref<128x128xbf16, #tpu.memory_space<vmem>>, %arg9: memref<1x128xf32, #tpu.memory_space<vmem>>, %arg10: memref<8x128xf32, #tpu.memory_space<vmem>>, %arg11: memref<8x128xf32, #tpu.memory_space<vmem>>) attributes {dimension_semantics = [#tpu.dimension_semantics<parallel>, #tpu.dimension_semantics<arbitrary>], iteration_bounds = array<i64: 2, 2>, scalar_prefetch = 0 : i64, scratch_operands = 1 : i64, tpu.core_type = #tpu.core_type<tc>, window_params = [{transform_indices = @transform_0, window_bounds = array<i64: 16, 16>}, {transform_indices = @transform_1, window_bounds = array<i64: 16, 1>}, {pipeline_mode = #tpu.pipeline_mode<synchronous>, transform_indices = @transform_2, window_bounds = array<i64: 16, 128>}, {pipeline_mode = #tpu.pipeline_mode<synchronous>, transform_indices = @transform_3, window_bounds = array<i64: 1, 128>}, {pipeline_mode = #tpu.pipeline_mode<synchronous>, transform_indices = @transform_4, window_bounds = array<i64: 128, 128>}, {pipeline_mode = #tpu.pipeline_mode<synchronous>, transform_indices = @transform_5, window_bounds = array<i64: 1, 128>}, {pipeline_mode = #tpu.pipeline_mode<synchronous>, transform_indices = @transform_6, window_bounds = array<i64: 128, 128>}, {pipeline_mode = #tpu.pipeline_mode<synchronous>, transform_indices = @transform_7, window_bounds = array<i64: 1, 128>}, {transform_indices = @transform_8, window_bounds = array<i64: 8, 128>}]} {
    %c0_i32 = arith.constant 0 : i32
    %0 = arith.cmpi eq, %arg1, %c0_i32 : i32
    %1 = arith.extui %0 : i1 to i32
    %c0_i32_0 = arith.constant 0 : i32
    %2 = arith.cmpi ne, %1, %c0_i32_0 : i32
    scf.if %2 {
      %cst_26 = arith.constant 0.000000e+00 : f32
      %40 = vector.broadcast %cst_26 : f32 to vector<8x128xf32>
      %c0_27 = arith.constant 0 : index
      %c0_28 = arith.constant 0 : index
      %41 = vector.load %arg11[%c0_27, %c0_28] : memref<8x128xf32, #tpu.memory_space<vmem>>, vector<8x128xf32>
      tpu.vector_store %arg11[%c0_27, %c0_28], %40 {strides = array<i32>} : memref<8x128xf32, #tpu.memory_space<vmem>>, vector<8x128xf32>,
    } else {
    }
    %c0 = arith.constant 0 : index
    %c0_1 = arith.constant 0 : index
    %3 = vector.load %arg2[%c0, %c0_1] : memref<16x16xbf16, #tpu.memory_space<vmem>>, vector<16x16xbf16>
    %c0_2 = arith.constant 0 : index
    %c0_3 = arith.constant 0 : index
    %4 = vector.load %arg4[%c0_2, %c0_3] : memref<16x128xbf16, #tpu.memory_space<vmem>>, vector<16x128xbf16>
    %cst = arith.constant dense<0.000000e+00> : vector<16x128xf32>
    %5 = tpu.matmul %3, %4, %cst {dimension_numbers = #tpu.dot_dimension_numbers<[1], [0], [0], [1], [0, 0, 1, 1], [], []>} : vector<16x16xbf16>, vector<16x128xbf16>, vector<16x128xf32> -> vector<16x128xf32>
    %c0_4 = arith.constant 0 : index
    %c0_5 = arith.constant 0 : index
    %6 = vector.load %arg5[%c0_4, %c0_5] : memref<1x128xf32, #tpu.memory_space<vmem>>, vector<1x128xf32>
    %7 = vector.broadcast %6 : vector<1x128xf32> to vector<16x128xf32>
    %8 = arith.addf %5, %7 : vector<16x128xf32>
    %cst_6 = arith.constant 0.000000e+00 : f32
    %9 = vector.broadcast %cst_6 : f32 to vector<16x128xf32>
    %10 = arith.maximumf %8, %9 : vector<16x128xf32>
    %11 = arith.truncf %10 : vector<16x128xf32> to vector<16x128xbf16>
    %c0_7 = arith.constant 0 : index
    %c0_8 = arith.constant 0 : index
    %12 = vector.load %arg6[%c0_7, %c0_8] : memref<128x128xbf16, #tpu.memory_space<vmem>>, vector<128x128xbf16>
    %cst_9 = arith.constant dense<0.000000e+00> : vector<16x128xf32>
    %13 = tpu.matmul %11, %12, %cst_9 {dimension_numbers = #tpu.dot_dimension_numbers<[1], [0], [0], [1], [0, 0, 1, 1], [], []>} : vector<16x128xbf16>, vector<128x128xbf16>, vector<16x128xf32> -> vector<16x128xf32>
    %c0_10 = arith.constant 0 : index
    %c0_11 = arith.constant 0 : index
    %14 = vector.load %arg7[%c0_10, %c0_11] : memref<1x128xf32, #tpu.memory_space<vmem>>, vector<1x128xf32>
    %15 = vector.broadcast %14 : vector<1x128xf32> to vector<16x128xf32>
    %16 = arith.addf %13, %15 : vector<16x128xf32>
    %cst_12 = arith.constant 0.000000e+00 : f32
    %17 = vector.broadcast %cst_12 : f32 to vector<16x128xf32>
    %18 = arith.maximumf %16, %17 : vector<16x128xf32>
    %19 = arith.truncf %18 : vector<16x128xf32> to vector<16x128xbf16>
    %c0_13 = arith.constant 0 : index
    %c0_14 = arith.constant 0 : index
    %20 = vector.load %arg8[%c0_13, %c0_14] : memref<128x128xbf16, #tpu.memory_space<vmem>>, vector<128x128xbf16>
    %cst_15 = arith.constant dense<0.000000e+00> : vector<16x128xf32>
    %21 = tpu.matmul %19, %20, %cst_15 {dimension_numbers = #tpu.dot_dimension_numbers<[1], [0], [0], [1], [0, 0, 1, 1], [], []>} : vector<16x128xbf16>, vector<128x128xbf16>, vector<16x128xf32> -> vector<16x128xf32>
    %c0_16 = arith.constant 0 : index
    %c0_17 = arith.constant 0 : index
    %22 = vector.load %arg9[%c0_16, %c0_17] : memref<1x128xf32, #tpu.memory_space<vmem>>, vector<1x128xf32>
    %23 = vector.broadcast %22 : vector<1x128xf32> to vector<16x128xf32>
    %24 = arith.addf %21, %23 : vector<16x128xf32>
    %c0_18 = arith.constant 0 : index
    %c0_19 = arith.constant 0 : index
    %25 = vector.load %arg3[%c0_18, %c0_19] : memref<16x1xi32, #tpu.memory_space<vmem>>, vector<16x1xi32>
    %26 = tpu.iota {dimensions = array<i32: 1>} : vector<16x8xi32>
    %27 = vector.broadcast %25 : vector<16x1xi32> to vector<16x8xi32>
    %28 = arith.cmpi eq, %27, %26 : vector<16x8xi32>
    %29 = arith.extui %28 : vector<16x8xi1> to vector<16x8xi32>
    %30 = arith.sitofp %29 : vector<16x8xi32> to vector<16x8xf32>
    %31 = arith.truncf %30 : vector<16x8xf32> to vector<16x8xbf16>
    %c0_20 = arith.constant 0 : index
    %c0_21 = arith.constant 0 : index
    %32 = vector.load %arg11[%c0_20, %c0_21] : memref<8x128xf32, #tpu.memory_space<vmem>>, vector<8x128xf32>
    %33 = arith.truncf %24 : vector<16x128xf32> to vector<16x128xbf16>
    %cst_22 = arith.constant dense<0.000000e+00> : vector<8x128xf32>
    %34 = tpu.matmul %31, %33, %cst_22 {dimension_numbers = #tpu.dot_dimension_numbers<[0], [0], [1], [1], [0, 1, 1, 1], [], []>} : vector<16x8xbf16>, vector<16x128xbf16>, vector<8x128xf32> -> vector<8x128xf32>
    %35 = arith.addf %32, %34 : vector<8x128xf32>
    %c0_23 = arith.constant 0 : index
    %c0_24 = arith.constant 0 : index
    %36 = vector.load %arg11[%c0_23, %c0_24] : memref<8x128xf32, #tpu.memory_space<vmem>>, vector<8x128xf32>
    tpu.vector_store %arg11[%c0_23, %c0_24], %35 {strides = array<i32>} : memref<8x128xf32, #tpu.memory_space<vmem>>, vector<8x128xf32>,
    %c1_i32 = arith.constant 1 : i32
    %37 = arith.cmpi eq, %arg1, %c1_i32 : i32
    %38 = arith.extui %37 : i1 to i32
    %c0_i32_25 = arith.constant 0 : i32
    %39 = arith.cmpi ne, %38, %c0_i32_25 : i32
    scf.if %39 {
      %c0_26 = arith.constant 0 : index
      %c0_27 = arith.constant 0 : index
      %40 = vector.load %arg11[%c0_26, %c0_27] : memref<8x128xf32, #tpu.memory_space<vmem>>, vector<8x128xf32>
      %c0_28 = arith.constant 0 : index
      %c0_29 = arith.constant 0 : index
      %41 = vector.load %arg10[%c0_28, %c0_29] : memref<8x128xf32, #tpu.memory_space<vmem>>, vector<8x128xf32>
      tpu.vector_store %arg10[%c0_28, %c0_29], %40 {strides = array<i32>} : memref<8x128xf32, #tpu.memory_space<vmem>>, vector<8x128xf32>,
    } else {
    }
    return
  }
  func.func @transform_0(%arg0: i32, %arg1: i32) -> (i32, i32) {
    %c2_i32 = arith.constant 2 : i32
    %0 = arith.muli %arg0, %c2_i32 : i32
    %1 = arith.addi %0, %arg1 : i32
    %c0_i32 = arith.constant 0 : i32
    %c0_i32_0 = arith.constant 0 : i32
    return %1, %c0_i32 : i32, i32
  }
  func.func @transform_1(%arg0: i32, %arg1: i32) -> (i32, i32) {
    %c2_i32 = arith.constant 2 : i32
    %0 = arith.muli %arg0, %c2_i32 : i32
    %1 = arith.addi %0, %arg1 : i32
    %c0_i32 = arith.constant 0 : i32
    %c0_i32_0 = arith.constant 0 : i32
    return %1, %c0_i32 : i32, i32
  }
  func.func @transform_2(%arg0: i32, %arg1: i32) -> (i32, i32) {
    %c0_i32 = arith.constant 0 : i32
    %c0_i32_0 = arith.constant 0 : i32
    %c0_i32_1 = arith.constant 0 : i32
    return %c0_i32, %c0_i32_0 : i32, i32
  }
  func.func @transform_3(%arg0: i32, %arg1: i32) -> (i32, i32) {
    %c0_i32 = arith.constant 0 : i32
    %c0_i32_0 = arith.constant 0 : i32
    %c0_i32_1 = arith.constant 0 : i32
    return %c0_i32, %c0_i32_0 : i32, i32
  }
  func.func @transform_4(%arg0: i32, %arg1: i32) -> (i32, i32) {
    %c0_i32 = arith.constant 0 : i32
    %c0_i32_0 = arith.constant 0 : i32
    %c0_i32_1 = arith.constant 0 : i32
    return %c0_i32, %c0_i32_0 : i32, i32
  }
  func.func @transform_5(%arg0: i32, %arg1: i32) -> (i32, i32) {
    %c0_i32 = arith.constant 0 : i32
    %c0_i32_0 = arith.constant 0 : i32
    %c0_i32_1 = arith.constant 0 : i32
    return %c0_i32, %c0_i32_0 : i32, i32
  }
  func.func @transform_6(%arg0: i32, %arg1: i32) -> (i32, i32) {
    %c0_i32 = arith.constant 0 : i32
    %c0_i32_0 = arith.constant 0 : i32
    %c0_i32_1 = arith.constant 0 : i32
    return %c0_i32, %c0_i32_0 : i32, i32
  }
  func.func @transform_7(%arg0: i32, %arg1: i32) -> (i32, i32) {
    %c0_i32 = arith.constant 0 : i32
    %c0_i32_0 = arith.constant 0 : i32
    %c0_i32_1 = arith.constant 0 : i32
    return %c0_i32, %c0_i32_0 : i32, i32
  }
  func.func @transform_8(%arg0: i32, %arg1: i32) -> (i32, i32) {
    %c0_i32 = arith.constant 0 : i32
    %c0_i32_0 = arith.constant 0 : i32
    return %arg0, %c0_i32 : i32, i32
  }
}

</mosaic_0001>

<llo_original>
// kernel: tpu_custom_call.1
$region0: #{tpu_custom_call.1}
  #allocation0 [shape = 'u32[]', space=smem, size = 0x4, offset = 0x4, fixed_abs, tag = 'smem constant byte address 0x4 - core index']
  #allocation1 [shape = 'u32[144,128]{1,0:T(1,128)}', space=vmem, size = 0x12000, scoped, tag = 'internal scratch']
  #allocation2 [shape = 'f32[8,128]{1,0:T(8,128)}', space=vmem, size = 0x1000, scoped, tag = 'scratch operand']
  %s0 = inlined_call_operand.vmem [shape: bf16[64,16], index: 0, kind: input, shape index: {}]
  %s1 = inlined_call_operand.vmem [shape: s32[64,1], index: 1, kind: input, shape index: {}]
  %s2 = inlined_call_operand.vmem [shape: bf16[16,128], index: 2, kind: input, shape index: {}]
  %s3 = inlined_call_operand.vmem [shape: f32[1,128], index: 3, kind: input, shape index: {}]
  %s4 = inlined_call_operand.vmem [shape: bf16[128,128], index: 4, kind: input, shape index: {}]
  %s5 = inlined_call_operand.vmem [shape: f32[1,128], index: 5, kind: input, shape index: {}]
  %s6 = inlined_call_operand.hbm [shape: bf16[128,128], index: 6, kind: input, shape index: {}]
  %s7 = inlined_call_operand.vmem [shape: f32[1,128], index: 7, kind: input, shape index: {}]
  %s8 = inlined_call_operand.hbm [shape: f32[16,128], index: 8, kind: output, shape index: {}]
  %s9 = sld [smem:[#allocation0]]
  $region77: #{tpu_custom_call.1} parent=0
    _
  %s11 = ssub.s32 1, %s9
  %s12 = scalar_select 0, %s11, %s9
  $region1: #{tpu_custom_call.1} parent=0
    #allocation3 [shape = 'u8[32768]{0}', space=vmem, size = 0x8000, scoped, tag = 'input window, operand 6, single buffered']
    #allocation4 [shape = 's32[2]{0}', space=sflag, size = 0x8, scoped, tag = 'scoped memory for tpu_custom_call.1']
    #allocation5 [shape = 's32[2]{0}', space=sflag, size = 0x8, scoped, tag = 'scoped memory for tpu_custom_call.1']
    #allocation6 [shape = 'u8[8192]{0}', space=vmem, size = 0x2000, scoped, tag = 'output window, operand 0']
    %13 = vsyncpa [#allocation4], 0
    %14 = vsyncpa [#allocation5], 0
    %s15 = scalar_lea.sflag [#allocation5], 1
    %16 = vsyncpa %s15, 0
    loop: start=0, step=1, limit=6
    $region2: #{tpu_custom_call.1} parent=1 // loop_pre_header
      _
    $region3: #{tpu_custom_call.1} parent=1 // loop_header
      %s18 = sphi 0, %s22
      %p19 = scmp.ge.s32.totalorder %s18, 6
      %s25 = sphi 0, %s37
      %s26 = sphi 0, %s33
      %s27 = sphi 0, %s25
      %s28 = sphi 0, %s26
      %s29 = sphi 0, %s27
      %s30 = sphi 0, %s28
      %s44 = sphi 0, %s46
      %s47 = sphi 0, %s44
      %s48 = sphi 0, %s47
      %s64 = sphi 0, %s48
      %s74 = sphi 0, %s76
      %s77 = sphi 0, %s74
      %s78 = sphi 0, %s77
      %s94 = sphi 0, %s78
      %s98 = sphi 0, %s98
      %s100 = sphi 0, %s98
      %s101 = sphi 0, %s100
      %s115 = sphi 0, %s101
      %s119 = sphi 0, %s119
      %s121 = sphi 0, %s119
      %s122 = sphi 0, %s121
      %s136 = sphi 0, %s122
      %s140 = sphi 0, %s140
      %s142 = sphi 0, %s140
      %s143 = sphi 0, %s142
      %s157 = sphi 0, %s143
      %s161 = sphi 0, %s161
      %s163 = sphi 0, %s161
      %s164 = sphi 0, %s163
      %s178 = sphi 0, %s164
      %s182 = sphi 0, %s182
      %s184 = sphi 0, %s182
      %s185 = sphi 0, %s184
      %s199 = sphi 0, %s185
      %s203 = sphi 0, %s203
      %s205 = sphi 0, %s203
      %s206 = sphi 0, %s205
      %s220 = sphi 0, %s206
      %s226 = sphi 0, %s228
      %s229 = sphi 0, %s226
      %s230 = sphi 0, %s229
      %s246 = sphi 0, %s230
    $region4: #{tpu_custom_call.1} parent=1 // loop_header_branch
      %21 = sbr.rel (%p19) target = $region8
    $region5: #{tpu_custom_call.1} parent=1 // loop_body
      %s23 = ssub.s32 %s18, 1
      %s24 = ssub.s32 %s18, 2
      %s31 = sadd.s32 1, %s26
      %p32 = scmp.ge.s32.totalorder %s31, 2
      %s33 = scalar_select %p32, 0, %s31
      %s34 = sadd.s32 1, %s25
      %s35 = scalar_select %p32, %s34, %s25
      %p36 = scmp.ge.s32.totalorder %s35, 2
      %s37 = scalar_select %p36, 0, %s35
      %s38 = smul.u32 %s25, 2
      %s39 = sadd.s32 %s38, %s26
      %s40 = smul.u32 %s37, 2
      %s41 = sadd.s32 %s40, %s33
      %s42 = ssub.s32 %s39, %s41
      %p43 = scmp.eq.s32.totalorder %s42, 0
      %s45 = sadd.s32 %s44, 1
      %s46 = scalar_select %p43, %s44, %s45
      %p49 = pneg %p43
      %p50 = scmp.eq.s32.totalorder %s18, 3
      %p51 = por %p49, %p50
      %p52 = scmp.ne.s32.totalorder %s44, %s47
      %p53 = scmp.eq.s32.totalorder %s18, 0
      %p54 = por %p52, %p53
      %p55 = scmp.ne.s32.totalorder %s44, %s47
      %p56 = scmp.eq.s32.totalorder %s23, 3
      %p57 = por %p55, %p56
      %p58 = scmp.ne.s32.totalorder %s47, %s48
      %p59 = scmp.eq.s32.totalorder %s23, 0
      %p60 = por %p58, %p59
      %p61 = scmp.ne.s32.totalorder %s47, %s48
      %p62 = scmp.eq.s32.totalorder %s24, 3
      %p63 = por %p61, %p62
      %p65 = scmp.ne.s32.totalorder %s48, %s64
      %p66 = scmp.eq.s32.totalorder %s24, 0
      %p67 = por %p65, %p66
      %s68 = smul.u32 %s25, 2
      %s69 = sadd.s32 %s68, %s26
      %s70 = smul.u32 %s37, 2
      %s71 = sadd.s32 %s70, %s33
      %s72 = ssub.s32 %s69, %s71
      %p73 = scmp.eq.s32.totalorder %s72, 0
      %s75 = sadd.s32 %s74, 1
      %s76 = scalar_select %p73, %s74, %s75
      %p79 = pneg %p73
      %p80 = scmp.eq.s32.totalorder %s18, 3
      %p81 = por %p79, %p80
      %p82 = scmp.ne.s32.totalorder %s74, %s77
      %p83 = scmp.eq.s32.totalorder %s18, 0
      %p84 = por %p82, %p83
      %p85 = scmp.ne.s32.totalorder %s74, %s77
      %p86 = scmp.eq.s32.totalorder %s23, 3
      %p87 = por %p85, %p86
      %p88 = scmp.ne.s32.totalorder %s77, %s78
      %p89 = scmp.eq.s32.totalorder %s23, 0
      %p90 = por %p88, %p89
      %p91 = scmp.ne.s32.totalorder %s77, %s78
      %p92 = scmp.eq.s32.totalorder %s24, 3
      %p93 = por %p91, %p92
      %p95 = scmp.ne.s32.totalorder %s78, %s94
      %p96 = scmp.eq.s32.totalorder %s24, 0
      %p97 = por %p95, %p96
      %s99 = sadd.s32 %s98, 1
      %p102 = scmp.eq.s32.totalorder %s18, 3
      %p103 = scmp.ne.s32.totalorder %s98, %s100
      %p104 = scmp.eq.s32.totalorder %s18, 0
      %p105 = por %p103, %p104
      %p106 = scmp.ne.s32.totalorder %s98, %s100
      %p107 = scmp.eq.s32.totalorder %s23, 3
      %p108 = por %p106, %p107
      %p109 = scmp.ne.s32.totalorder %s100, %s101
      %p110 = scmp.eq.s32.totalorder %s23, 0
      %p111 = por %p109, %p110
      %p112 = scmp.ne.s32.totalorder %s100, %s101
      %p113 = scmp.eq.s32.totalorder %s24, 3
      %p114 = por %p112, %p113
      %p116 = scmp.ne.s32.totalorder %s101, %s115
      %p117 = scmp.eq.s32.totalorder %s24, 0
      %p118 = por %p116, %p117
      %s120 = sadd.s32 %s119, 1
      %p123 = scmp.eq.s32.totalorder %s18, 3
      %p124 = scmp.ne.s32.totalorder %s119, %s121
      %p125 = scmp.eq.s32.totalorder %s18, 0
      %p126 = por %p124, %p125
      %p127 = scmp.ne.s32.totalorder %s119, %s121
      %p128 = scmp.eq.s32.totalorder %s23, 3
      %p129 = por %p127, %p128
      %p130 = scmp.ne.s32.totalorder %s121, %s122
      %p131 = scmp.eq.s32.totalorder %s23, 0
      %p132 = por %p130, %p131
      %p133 = scmp.ne.s32.totalorder %s121, %s122
      %p134 = scmp.eq.s32.totalorder %s24, 3
      %p135 = por %p133, %p134
      %p137 = scmp.ne.s32.totalorder %s122, %s136
      %p138 = scmp.eq.s32.totalorder %s24, 0
      %p139 = por %p137, %p138
      %s141 = sadd.s32 %s140, 1
      %p144 = scmp.eq.s32.totalorder %s18, 3
      %p145 = scmp.ne.s32.totalorder %s140, %s142
      %p146 = scmp.eq.s32.totalorder %s18, 0
      %p147 = por %p145, %p146
      %p148 = scmp.ne.s32.totalorder %s140, %s142
      %p149 = scmp.eq.s32.totalorder %s23, 3
      %p150 = por %p148, %p149
      %p151 = scmp.ne.s32.totalorder %s142, %s143
      %p152 = scmp.eq.s32.totalorder %s23, 0
      %p153 = por %p151, %p152
      %p154 = scmp.ne.s32.totalorder %s142, %s143
      %p155 = scmp.eq.s32.totalorder %s24, 3
      %p156 = por %p154, %p155
      %p158 = scmp.ne.s32.totalorder %s143, %s157
      %p159 = scmp.eq.s32.totalorder %s24, 0
      %p160 = por %p158, %p159
      %s162 = sadd.s32 %s161, 1
      %p165 = scmp.eq.s32.totalorder %s18, 3
      %p166 = scmp.ne.s32.totalorder %s161, %s163
      %p167 = scmp.eq.s32.totalorder %s18, 0
      %p168 = por %p166, %p167
      %p169 = scmp.ne.s32.totalorder %s161, %s163
      %p170 = scmp.eq.s32.totalorder %s23, 3
      %p171 = por %p169, %p170
      %p172 = scmp.ne.s32.totalorder %s163, %s164
      %p173 = scmp.eq.s32.totalorder %s23, 0
      %p174 = por %p172, %p173
      %p175 = scmp.ne.s32.totalorder %s163, %s164
      %p176 = scmp.eq.s32.totalorder %s24, 3
      %p177 = por %p175, %p176
      %p179 = scmp.ne.s32.totalorder %s164, %s178
      %p180 = scmp.eq.s32.totalorder %s24, 0
      %p181 = por %p179, %p180
      %s183 = sadd.s32 %s182, 1
      %p186 = scmp.eq.s32.totalorder %s18, 3
      %p187 = scmp.ne.s32.totalorder %s182, %s184
      %p188 = scmp.eq.s32.totalorder %s18, 0
      %p189 = por %p187, %p188
      %p190 = scmp.ne.s32.totalorder %s182, %s184
      %p191 = scmp.eq.s32.totalorder %s23, 3
      %p192 = por %p190, %p191
      %p193 = scmp.ne.s32.totalorder %s184, %s185
      %p194 = scmp.eq.s32.totalorder %s23, 0
      %p195 = por %p193, %p194
      %p196 = scmp.ne.s32.totalorder %s184, %s185
      %p197 = scmp.eq.s32.totalorder %s24, 3
      %p198 = por %p196, %p197
      %p200 = scmp.ne.s32.totalorder %s185, %s199
      %p201 = scmp.eq.s32.totalorder %s24, 0
      %p202 = por %p200, %p201
      %s204 = sadd.s32 %s203, 1
      %p207 = scmp.eq.s32.totalorder %s18, 3
      %p208 = scmp.ne.s32.totalorder %s203, %s205
      %p209 = scmp.eq.s32.totalorder %s18, 0
      %p210 = por %p208, %p209
      %p211 = scmp.ne.s32.totalorder %s203, %s205
      %p212 = scmp.eq.s32.totalorder %s23, 3
      %p213 = por %p211, %p212
      %p214 = scmp.ne.s32.totalorder %s205, %s206
      %p215 = scmp.eq.s32.totalorder %s23, 0
      %p216 = por %p214, %p215
      %p217 = scmp.ne.s32.totalorder %s205, %s206
      %p218 = scmp.eq.s32.totalorder %s24, 3
      %p219 = por %p217, %p218
      %p221 = scmp.ne.s32.totalorder %s206, %s220
      %p222 = scmp.eq.s32.totalorder %s24, 0
      %p223 = por %p221, %p222
      %s224 = ssub.s32 %s25, %s37
      %p225 = scmp.eq.s32.totalorder %s224, 0
      %s227 = sadd.s32 %s226, 1
      %s228 = scalar_select %p225, %s226, %s227
      %p231 = pneg %p225
      %p232 = scmp.eq.s32.totalorder %s18, 3
      %p233 = por %p231, %p232
      %p234 = scmp.ne.s32.totalorder %s226, %s229
      %p235 = scmp.eq.s32.totalorder %s18, 0
      %p236 = por %p234, %p235
      %p237 = scmp.ne.s32.totalorder %s226, %s229
      %p238 = scmp.eq.s32.totalorder %s23, 3
      %p239 = por %p237, %p238
      %p240 = scmp.ne.s32.totalorder %s229, %s230
      %p241 = scmp.eq.s32.totalorder %s23, 0
      %p242 = por %p240, %p241
      %p243 = scmp.ne.s32.totalorder %s229, %s230
      %p244 = scmp.eq.s32.totalorder %s24, 3
      %p245 = por %p243, %p244
      %p247 = scmp.ne.s32.totalorder %s230, %s246
      %p248 = scmp.eq.s32.totalorder %s24, 0
      %p249 = por %p247, %p248
      %p250 = scmp.le.s32.totalorder 1, %s18
      %p251 = scmp.lt.s32.totalorder %s18, 5
      %p252 = pnand %p250, %p251
      %p253 = pneg %p252
      // Predicated region
      $region9: #{tpu_custom_call.1} parent=5 // pred_check
        _
      $region10: #{tpu_custom_call.1} parent=5 // pred_check_branch
        %255 = sbr.rel (%p252) target = $region12
      $region11: #{tpu_custom_call.1} parent=5 // pred_region
        %s256 = ssub.s32 %s18, 1
        // Predicated region
        $region13: #{tpu_custom_call.1} parent=11 // pred_check
          %p257 = pneg %p111
        $region14: #{tpu_custom_call.1} parent=11 // pred_check_branch
          %259 = sbr.rel (%p257) target = $region16
        $region15: #{tpu_custom_call.1} parent=11 // pred_region
          _
        $region16: #{tpu_custom_call.1} parent=11 // pred_fallthru
          _
        // Predicated region
        $region17: #{tpu_custom_call.1} parent=11 // pred_check
          %p260 = pneg %p132
        $region18: #{tpu_custom_call.1} parent=11 // pred_check_branch
          %262 = sbr.rel (%p260) target = $region20
        $region19: #{tpu_custom_call.1} parent=11 // pred_region
          _
        $region20: #{tpu_custom_call.1} parent=11 // pred_fallthru
          _
        // Predicated region
        $region21: #{tpu_custom_call.1} parent=11 // pred_check
          %p263 = pneg %p153
        $region22: #{tpu_custom_call.1} parent=11 // pred_check_branch
          %265 = sbr.rel (%p263) target = $region24
        $region23: #{tpu_custom_call.1} parent=11 // pred_region
          _
        $region24: #{tpu_custom_call.1} parent=11 // pred_fallthru
          _
        // Predicated region
        $region25: #{tpu_custom_call.1} parent=11 // pred_check
          %p266 = pneg %p174
        $region26: #{tpu_custom_call.1} parent=11 // pred_check_branch
          %268 = sbr.rel (%p266) target = $region28
        $region27: #{tpu_custom_call.1} parent=11 // pred_region
          _
        $region28: #{tpu_custom_call.1} parent=11 // pred_fallthru
          _
        // Predicated region
        $region29: #{tpu_custom_call.1} parent=11 // pred_check
          %p269 = pneg %p195
        $region30: #{tpu_custom_call.1} parent=11 // pred_check_branch
          %271 = sbr.rel (%p269) target = $region32
        $region31: #{tpu_custom_call.1} parent=11 // pred_region
          %s273 = ssub.s32 1024, 1024
          %274 = vsyncadd [#allocation4], %s273
          %s275 = sshll.u32 [#allocation3], 4
          %s276 = int_to_ptr.vmem [resolvable:$true] %s275
          %281 = dma.hbm_to_vmem [thread:$0]  %s6, 1024, %s276, [#allocation4], 64, 64, 4
        $region32: #{tpu_custom_call.1} parent=11 // pred_fallthru
          _
        // Predicated region
        $region33: #{tpu_custom_call.1} parent=11 // pred_check
          %p282 = pneg %p216
        $region34: #{tpu_custom_call.1} parent=11 // pred_check_branch
          %284 = sbr.rel (%p282) target = $region36
        $region35: #{tpu_custom_call.1} parent=11 // pred_region
          _
        $region36: #{tpu_custom_call.1} parent=11 // pred_fallthru
          _
      $region12: #{tpu_custom_call.1} parent=5 // pred_fallthru
        _
      %p285 = scmp.lt.s32.totalorder %s18, 4
      // Predicated region
      $region37: #{tpu_custom_call.1} parent=5 // pred_check
        %p286 = pneg %p285
      $region38: #{tpu_custom_call.1} parent=5 // pred_check_branch
        %288 = sbr.rel (%p286) target = $region40
      $region39: #{tpu_custom_call.1} parent=5 // pred_region
        // Predicated region
        $region41: #{tpu_custom_call.1} parent=39 // pred_check
          %p289 = pneg %p54
        $region42: #{tpu_custom_call.1} parent=39 // pred_check_branch
          %291 = sbr.rel (%p289) target = $region44
        $region43: #{tpu_custom_call.1} parent=39 // pred_region
          %s292 = smul.u32 %s25, 2
          %s293 = sadd.s32 %s292, %s26
          %s294 = smul.u32 2, %s293
          %p295 = scmp.lt.s32.totalorder %s294, 7
          %s296 = scalar_select %p295, %s294, 7
          %s297 = smul.addr %s296, 4
          %s298 = scalar_lea.vmem %s0, %s297
          %s299 = smul.u32 %s25, 2
          %s300 = sadd.s32 %s299, %s26
          %s301 = smul.u32 2, %s300
        $region44: #{tpu_custom_call.1} parent=39 // pred_fallthru
          _
        // Predicated region
        $region45: #{tpu_custom_call.1} parent=39 // pred_check
          %p302 = pneg %p84
        $region46: #{tpu_custom_call.1} parent=39 // pred_check_branch
          %304 = sbr.rel (%p302) target = $region48
        $region47: #{tpu_custom_call.1} parent=39 // pred_region
          %s305 = smul.u32 %s25, 2
          %s306 = sadd.s32 %s305, %s26
          %s307 = smul.u32 2, %s306
          %p308 = scmp.lt.s32.totalorder %s307, 7
          %s309 = scalar_select %p308, %s307, 7
          %s310 = smul.addr %s309, 8
          %s311 = scalar_lea.vmem %s1, %s310
          %s312 = smul.u32 %s25, 2
          %s313 = sadd.s32 %s312, %s26
          %s314 = smul.u32 2, %s313
        $region48: #{tpu_custom_call.1} parent=39 // pred_fallthru
          _
      $region40: #{tpu_custom_call.1} parent=5 // pred_fallthru
        _
      %p315 = scmp.le.s32.totalorder 1, %s18
      %p316 = scmp.lt.s32.totalorder %s18, 5
      %p317 = pnand %p315, %p316
      %p318 = pneg %p317
      // Predicated region
      $region49: #{tpu_custom_call.1} parent=5 // pred_check
        _
      $region50: #{tpu_custom_call.1} parent=5 // pred_check_branch
        %320 = sbr.rel (%p317) target = $region52
      $region51: #{tpu_custom_call.1} parent=5 // pred_region
        %s321 = ssub.s32 %s18, 1
        // Predicated region
        $region53: #{tpu_custom_call.1} parent=51 // pred_check
          %p322 = pneg %p195
        $region54: #{tpu_custom_call.1} parent=51 // pred_check_branch
          %324 = sbr.rel (%p322) target = $region56
        $region55: #{tpu_custom_call.1} parent=51 // pred_region
          %325 = dma.done [#allocation4], 1024
        $region56: #{tpu_custom_call.1} parent=51 // pred_fallthru
          _
        %s326 = smul.u32 %s27, 2
        %s327 = sadd.s32 %s326, %s28
        %s328 = smul.u32 2, %s327
        %p329 = scmp.lt.s32.totalorder %s328, 7
        %s330 = scalar_select %p329, %s328, 7
        %s331 = smul.addr %s330, 4
        %s332 = scalar_lea.vmem %s0, %s331
        %p333 = pneg %p60
        %p334 = pneg %p57
        %s335 = smul.u32 %s27, 2
        %s336 = sadd.s32 %s335, %s28
        %s337 = smul.u32 2, %s336
        %p338 = scmp.lt.s32.totalorder %s337, 7
        %s339 = scalar_select %p338, %s337, 7
        %s340 = smul.addr %s339, 8
        %s341 = scalar_lea.vmem %s1, %s340
        %p342 = pneg %p90
        %p343 = pneg %p87
        %p344 = pneg %p111
        %p345 = pneg %p108
        %p346 = pneg %p132
        %p347 = pneg %p129
        %p348 = pneg %p153
        %p349 = pneg %p150
        %p350 = pneg %p174
        %p351 = pneg %p171
        %p352 = pneg %p195
        %p353 = pneg %p192
        %p354 = pneg %p216
        %p355 = pneg %p213
        %p356 = pneg %p242
        %p357 = pneg %p239
        %s358 = sand.u32 %s229, 1
        %s359 = scalar_lea.sflag [#allocation5], %s358
        %s360 = sand.u32 %s229, 1
        %s361 = smul.addr %s360, 8
        %s362 = scalar_lea.vmem [#allocation6], %s361
        %s363 = smul.u32 %s27, 2
        %s364 = sadd.s32 %s363, %s28
        %s365 = smul.u32 2, %s364
        %p366 = scmp.lt.s32.totalorder %s365, 7
        %s367 = scalar_select %p366, %s365, 7
        %s368 = smul.addr %s367, 4
        %s369 = scalar_lea.vmem %s0, %s368
        %s370 = smul.u32 %s27, 2
        %s371 = sadd.s32 %s370, %s28
        %s372 = smul.u32 2, %s371
        %s373 = smul.u32 %s27, 2
        %s374 = sadd.s32 %s373, %s28
        %s375 = smul.u32 2, %s374
        %p376 = scmp.lt.s32.totalorder %s375, 7
        %s377 = scalar_select %p376, %s375, 7
        %s378 = smul.addr %s377, 8
        %s379 = scalar_lea.vmem %s1, %s378
        %s380 = smul.u32 %s27, 2
        %s381 = sadd.s32 %s380, %s28
        %s382 = smul.u32 2, %s381
        %p384 = scmp.eq.s32.totalorder %s28, 0
        // Predicated region
        $region57: #{tpu_custom_call.1} parent=51 // pred_check
          %p385 = pneg %p384
        $region58: #{tpu_custom_call.1} parent=51 // pred_check_branch
          %387 = sbr.rel (%p385) target = $region60
        $region59: #{tpu_custom_call.1} parent=51 // pred_region
          %388 = vst [vmem:[#allocation2] sm:$0xff] 0.0
        $region60: #{tpu_custom_call.1} parent=51 // pred_fallthru
          _
        %v389 = vld [vmem:[%s369] sm:$0xf]
        %v390 = vld [vmem:[%s369 + $0x4] sm:$0xf]
        %v391 = vld [vmem:[%s2] sm:$0xf]
        %v392 = vld [vmem:[%s2 + $0x4] sm:$0xf]
        %v393 = vld [vmem:[%s3] sm:$0x1]
        %v395 = vlaneseq
        %v396 = vshrl.u32 %v395, 7
        %v397 = vsub.s32 0, %v396
        %v398 = vrot.slane %v393, %v397
        %v402 = vunpack.c.l.b16 %v389
        %v403 = vunpack.c.l.b16 %v390
        %v404 = vpack.c.b16 %v403, %v402
        %v407 = vunpack.c.l.b16 %v391
        %v408 = vunpack.c.l.b16 %v392
        %v409 = vpack.c.b16 %v408, %v407
        %vm411 = vcmask 130048
        %v413 = vsel %vm411, %v404, 0
        %415 = vmatprep.subr.bf16.mxu0 0
        %416 = vmatpush1.bf16.msra.mxu0 %v409
        %417 = vmatprep.subr.bf16.mxu0 0
        %418 = vmatpush1.bf16.msra.mxu0 0
        %419 = vmatprep.subr.bf16.mxu0 0
        %420 = vmatpush1.bf16.msra.mxu0 0
        %421 = vmatprep.subr.bf16.mxu0 0
        %422 = vmatpush1.bf16.msra.mxu0 0
        %423 = vmatprep.subr.bf16.mxu0 0
        %424 = vmatpush1.bf16.msra.mxu0 0
        %425 = vmatprep.subr.bf16.mxu0 0
        %426 = vmatpush1.bf16.msra.mxu0 0
        %427 = vmatprep.subr.bf16.mxu0 0
        %428 = vmatpush1.bf16.msra.mxu0 0
        %429 = vmatprep.subr.bf16.mxu0 0
        %430 = vmatpush1.bf16.msra.mxu0 0
        %431 = vmatprep.subr.bf16.mxu0 0
        %432 = vmatpush1.bf16.msra.mxu0 0
        %433 = vmatprep.subr.bf16.mxu0 0
        %434 = vmatpush1.bf16.msra.mxu0 0
        %435 = vmatprep.subr.bf16.mxu0 0
        %436 = vmatpush1.bf16.msra.mxu0 0
        %437 = vmatprep.subr.bf16.mxu0 0
        %438 = vmatpush1.bf16.msra.mxu0 0
        %439 = vmatprep.subr.bf16.mxu0 0
        %440 = vmatpush1.bf16.msra.mxu0 0
        %441 = vmatprep.subr.bf16.mxu0 0
        %442 = vmatpush1.bf16.msra.mxu0 0
        %443 = vmatprep.subr.bf16.mxu0 0
        %444 = vmatpush1.bf16.msra.mxu0 0
        %445 = vmatprep.subr.bf16.mxu0 0
        %446 = vmatpush1.bf16.msra.mxu0 0
        %447 = vmatprep.mubr.bf16.mxu0 0
        %448 = vmatmul.mubr.bf16.gmra.mrb[0].mxu0 %v413
        %v449 = vpop.f32.mrb[0].mxu0
        %v450 = vadd.f32 %v398, %v449
        %v451 = vpop.f32.mrb[0].mxu0
        %v452 = vpop.f32.mrb[0].mxu0
        %v453 = vadd.f32 %v398, %v452
        %v454 = vpop.f32.mrb[0].mxu0
        %455 = vdwg.mxu0
        %v456 = vmax.f32 %v450, 0.0
        %v457 = vmax.f32 %v453, 0.0
        %v458 = vpack.c.bf16 %v457, %v456
        %v459 = vld [vmem:[%s4] sm:$0xf]
        %v460 = vld [vmem:[%s4 + $0x4] sm:$0xf]
        %v461 = vld [vmem:[%s4 + $0x8] sm:$0xf]
        %v462 = vld [vmem:[%s4 + $0xc] sm:$0xf]
        %v463 = vld [vmem:[%s4 + $0x10] sm:$0xf]
        %v464 = vld [vmem:[%s4 + $0x14] sm:$0xf]
        %v465 = vld [vmem:[%s4 + $0x18] sm:$0xf]
        %v466 = vld [vmem:[%s4 + $0x1c] sm:$0xf]
        %v467 = vld [vmem:[%s4 + $0x20] sm:$0xf]
        %v468 = vld [vmem:[%s4 + $0x24] sm:$0xf]
        %v469 = vld [vmem:[%s4 + $0x28] sm:$0xf]
        %v470 = vld [vmem:[%s4 + $0x2c] sm:$0xf]
        %v471 = vld [vmem:[%s4 + $0x30] sm:$0xf]
        %v472 = vld [vmem:[%s4 + $0x34] sm:$0xf]
        %v473 = vld [vmem:[%s4 + $0x38] sm:$0xf]
        %v474 = vld [vmem:[%s4 + $0x3c] sm:$0xf]
        %v475 = vld [vmem:[%s5] sm:$0x1]
        %v477 = vlaneseq
        %v478 = vshrl.u32 %v477, 7
        %v479 = vsub.s32 0, %v478
        %v480 = vrot.slane %v475, %v479
        %v498 = vunpack.c.l.b16 %v459
        %v499 = vunpack.c.l.b16 %v460
        %v500 = vunpack.c.l.b16 %v461
        %v501 = vunpack.c.l.b16 %v462
        %v502 = vunpack.c.l.b16 %v463
        %v503 = vunpack.c.l.b16 %v464
        %v504 = vunpack.c.l.b16 %v465
        %v505 = vunpack.c.l.b16 %v466
        %v506 = vunpack.c.l.b16 %v467
        %v507 = vunpack.c.l.b16 %v468
        %v508 = vunpack.c.l.b16 %v469
        %v509 = vunpack.c.l.b16 %v470
        %v510 = vunpack.c.l.b16 %v471
        %v511 = vunpack.c.l.b16 %v472
        %v512 = vunpack.c.l.b16 %v473
        %v513 = vunpack.c.l.b16 %v474
        %v514 = vpack.c.b16 %v499, %v498
        %v515 = vpack.c.b16 %v501, %v500
        %v516 = vpack.c.b16 %v503, %v502
        %v517 = vpack.c.b16 %v505, %v504
        %v518 = vpack.c.b16 %v507, %v506
        %v519 = vpack.c.b16 %v509, %v508
        %v520 = vpack.c.b16 %v511, %v510
        %v521 = vpack.c.b16 %v513, %v512
        %530 = vmatprep.subr.bf16.mxu0 0
        %531 = vmatpush1.bf16.msra.mxu0 %v514
        %532 = vmatprep.subr.bf16.mxu0 0
        %533 = vmatpush1.bf16.msra.mxu0 %v515
        %534 = vmatprep.subr.bf16.mxu0 0
        %535 = vmatpush1.bf16.msra.mxu0 %v516
        %536 = vmatprep.subr.bf16.mxu0 0
        %537 = vmatpush1.bf16.msra.mxu0 %v517
        %538 = vmatprep.subr.bf16.mxu0 0
        %539 = vmatpush1.bf16.msra.mxu0 %v518
        %540 = vmatprep.subr.bf16.mxu0 0
        %541 = vmatpush1.bf16.msra.mxu0 %v519
        %542 = vmatprep.subr.bf16.mxu0 0
        %543 = vmatpush1.bf16.msra.mxu0 %v520
        %544 = vmatprep.subr.bf16.mxu0 0
        %545 = vmatpush1.bf16.msra.mxu0 %v521
        %546 = vmatprep.subr.bf16.mxu0 0
        %547 = vmatpush1.bf16.msra.mxu0 0
        %548 = vmatprep.subr.bf16.mxu0 0
        %549 = vmatpush1.bf16.msra.mxu0 0
        %550 = vmatprep.subr.bf16.mxu0 0
        %551 = vmatpush1.bf16.msra.mxu0 0
        %552 = vmatprep.subr.bf16.mxu0 0
        %553 = vmatpush1.bf16.msra.mxu0 0
        %554 = vmatprep.subr.bf16.mxu0 0
        %555 = vmatpush1.bf16.msra.mxu0 0
        %556 = vmatprep.subr.bf16.mxu0 0
        %557 = vmatpush1.bf16.msra.mxu0 0
        %558 = vmatprep.subr.bf16.mxu0 0
        %559 = vmatpush1.bf16.msra.mxu0 0
        %560 = vmatprep.subr.bf16.mxu0 0
        %561 = vmatpush1.bf16.msra.mxu0 0
        %562 = vmatprep.mubr.bf16.mxu0 0
        %563 = vmatmul.mubr.bf16.gmra.mrb[0].mxu0 %v458
        %v564 = vpop.f32.mrb[0].mxu0
        %v565 = vadd.f32 %v480, %v564
        %v566 = vpop.f32.mrb[0].mxu0
        %v567 = vpop.f32.mrb[0].mxu0
        %v568 = vadd.f32 %v480, %v567
        %v569 = vpop.f32.mrb[0].mxu0
        %570 = vdwg.mxu0
        %v571 = vmax.f32 %v565, 0.0
        %v572 = vmax.f32 %v568, 0.0
        %v573 = vpack.c.bf16 %v572, %v571
        %v574 = vld [vmem:[#allocation3] sm:$0xf]
        %v575 = vld [vmem:[#allocation3 + $0x4] sm:$0xf]
        %v576 = vld [vmem:[#allocation3 + $0x8] sm:$0xf]
        %v577 = vld [vmem:[#allocation3 + $0xc] sm:$0xf]
        %v578 = vld [vmem:[#allocation3 + $0x10] sm:$0xf]
        %v579 = vld [vmem:[#allocation3 + $0x14] sm:$0xf]
        %v580 = vld [vmem:[#allocation3 + $0x18] sm:$0xf]
        %v581 = vld [vmem:[#allocation3 + $0x1c] sm:$0xf]
        %v582 = vld [vmem:[#allocation3 + $0x20] sm:$0xf]
        %v583 = vld [vmem:[#allocation3 + $0x24] sm:$0xf]
        %v584 = vld [vmem:[#allocation3 + $0x28] sm:$0xf]
        %v585 = vld [vmem:[#allocation3 + $0x2c] sm:$0xf]
        %v586 = vld [vmem:[#allocation3 + $0x30] sm:$0xf]
        %v587 = vld [vmem:[#allocation3 + $0x34] sm:$0xf]
        %v588 = vld [vmem:[#allocation3 + $0x38] sm:$0xf]
        %v589 = vld [vmem:[#allocation3 + $0x3c] sm:$0xf]
        %v590 = vld [vmem:[%s7] sm:$0x1]
        %v592 = vlaneseq
        %v593 = vshrl.u32 %v592, 7
        %v594 = vsub.s32 0, %v593
        %v595 = vrot.slane %v590, %v594
        %v613 = vunpack.c.l.b16 %v574
        %v614 = vunpack.c.l.b16 %v575
        %v615 = vunpack.c.l.b16 %v576
        %v616 = vunpack.c.l.b16 %v577
        %v617 = vunpack.c.l.b16 %v578
        %v618 = vunpack.c.l.b16 %v579
        %v619 = vunpack.c.l.b16 %v580
        %v620 = vunpack.c.l.b16 %v581
        %v621 = vunpack.c.l.b16 %v582
        %v622 = vunpack.c.l.b16 %v583
        %v623 = vunpack.c.l.b16 %v584
        %v624 = vunpack.c.l.b16 %v585
        %v625 = vunpack.c.l.b16 %v586
        %v626 = vunpack.c.l.b16 %v587
        %v627 = vunpack.c.l.b16 %v588
        %v628 = vunpack.c.l.b16 %v589
        %v629 = vpack.c.b16 %v614, %v613
        %v630 = vpack.c.b16 %v616, %v615
        %v631 = vpack.c.b16 %v618, %v617
        %v632 = vpack.c.b16 %v620, %v619
        %v633 = vpack.c.b16 %v622, %v621
        %v634 = vpack.c.b16 %v624, %v623
        %v635 = vpack.c.b16 %v626, %v625
        %v636 = vpack.c.b16 %v628, %v627
        %645 = vmatprep.subr.bf16.mxu0 0
        %646 = vmatpush1.bf16.msra.mxu0 %v629
        %647 = vmatprep.subr.bf16.mxu0 0
        %648 = vmatpush1.bf16.msra.mxu0 %v630
        %649 = vmatprep.subr.bf16.mxu0 0
        %650 = vmatpush1.bf16.msra.mxu0 %v631
        %651 = vmatprep.subr.bf16.mxu0 0
        %652 = vmatpush1.bf16.msra.mxu0 %v632
        %653 = vmatprep.subr.bf16.mxu0 0
        %654 = vmatpush1.bf16.msra.mxu0 %v633
        %655 = vmatprep.subr.bf16.mxu0 0
        %656 = vmatpush1.bf16.msra.mxu0 %v634
        %657 = vmatprep.subr.bf16.mxu0 0
        %658 = vmatpush1.bf16.msra.mxu0 %v635
        %659 = vmatprep.subr.bf16.mxu0 0
        %660 = vmatpush1.bf16.msra.mxu0 %v636
        %661 = vmatprep.subr.bf16.mxu0 0
        %662 = vmatpush1.bf16.msra.mxu0 0
        %663 = vmatprep.subr.bf16.mxu0 0
        %664 = vmatpush1.bf16.msra.mxu0 0
        %665 = vmatprep.subr.bf16.mxu0 0
        %666 = vmatpush1.bf16.msra.mxu0 0
        %667 = vmatprep.subr.bf16.mxu0 0
        %668 = vmatpush1.bf16.msra.mxu0 0
        %669 = vmatprep.subr.bf16.mxu0 0
        %670 = vmatpush1.bf16.msra.mxu0 0
        %671 = vmatprep.subr.bf16.mxu0 0
        %672 = vmatpush1.bf16.msra.mxu0 0
        %673 = vmatprep.subr.bf16.mxu0 0
        %674 = vmatpush1.bf16.msra.mxu0 0
        %675 = vmatprep.subr.bf16.mxu0 0
        %676 = vmatpush1.bf16.msra.mxu0 0
        %677 = vmatprep.mubr.bf16.mxu0 0
        %678 = vmatmul.mubr.bf16.gmra.mrb[0].mxu0 %v573
        %v679 = vpop.f32.mrb[0].mxu0
        %v680 = vadd.f32 %v595, %v679
        %v681 = vpop.f32.mrb[0].mxu0
        %v682 = vpop.f32.mrb[0].mxu0
        %v683 = vadd.f32 %v595, %v682
        %v684 = vpop.f32.mrb[0].mxu0
        %685 = vdwg.mxu0
        %v686 = vld [vmem:[%s379] sm:$0xff]
        %v687 = vld [vmem:[%s379 + $0x8] sm:$0xff]
        %v688 = vlaneseq
        %v689 = vand.u32 %v688, 127
        %690 = vset.pattern.permute.xlu0 0
        %691 = vperm.xlu0 %690, %v686
        %v692 = vpop.permute.xlu0 %691
        %693 = vset.pattern.permute.xlu0 0
        %694 = vperm.xlu0 %693, %v687
        %v695 = vpop.permute.xlu0 %694
        %vm696 = vcmp.eq.s32.totalorder %v692, %v689
        %vm697 = vcmp.eq.s32.totalorder %v695, %v689
        %v698 = vsel %vm696, 1, 0
        %v699 = vsel %vm697, 1, 0
        %v700 = vcvt.s32.f32 %v698
        %v701 = vcvt.s32.f32 %v699
        %v702 = vpack.c.bf16 %v701, %v700
        %v703 = vld [vmem:[#allocation2] sm:$0xff]
        %v704 = vpack.c.bf16 %v683, %v680
        %705 = vxpose.xlu0.c.b16.start [1/8] %v702, 128
        %706 = vxpose.xlu0.c.b16.cont [2/8] 0, 128
        %707 = vxpose.xlu0.c.b16.cont [3/8] 0, 128
        %708 = vxpose.xlu0.c.b16.cont [4/8] 0, 128
        %709 = vxpose.xlu0.c.b16.cont [5/8] 0, 128
        %710 = vxpose.xlu0.c.b16.cont [6/8] 0, 128
        %711 = vxpose.xlu0.c.b16.cont [7/8] 0, 128
        %712 = vxpose.xlu0.c.b16.end [8/8] 0, 128
        %v713 = vpop.trf.xlu0
        %v714 = vpop.trf.xlu0
        %v715 = vpop.trf.xlu0
        %v716 = vpop.trf.xlu0
        %v717 = vpop.trf.xlu0
        %v718 = vpop.trf.xlu0
        %v719 = vpop.trf.xlu0
        %v720 = vpop.trf.xlu0
        %v722 = vsel %vm411, %v713, 0
        %724 = vmatprep.subr.bf16.mxu0 0
        %725 = vmatpush1.bf16.msra.mxu0 %v704
        %726 = vmatprep.subr.bf16.mxu0 0
        %727 = vmatpush1.bf16.msra.mxu0 0
        %728 = vmatprep.subr.bf16.mxu0 0
        %729 = vmatpush1.bf16.msra.mxu0 0
        %730 = vmatprep.subr.bf16.mxu0 0
        %731 = vmatpush1.bf16.msra.mxu0 0
        %732 = vmatprep.subr.bf16.mxu0 0
        %733 = vmatpush1.bf16.msra.mxu0 0
        %734 = vmatprep.subr.bf16.mxu0 0
        %735 = vmatpush1.bf16.msra.mxu0 0
        %736 = vmatprep.subr.bf16.mxu0 0
        %737 = vmatpush1.bf16.msra.mxu0 0
        %738 = vmatprep.subr.bf16.mxu0 0
        %739 = vmatpush1.bf16.msra.mxu0 0
        %740 = vmatprep.subr.bf16.mxu0 0
        %741 = vmatpush1.bf16.msra.mxu0 0
        %742 = vmatprep.subr.bf16.mxu0 0
        %743 = vmatpush1.bf16.msra.mxu0 0
        %744 = vmatprep.subr.bf16.mxu0 0
        %745 = vmatpush1.bf16.msra.mxu0 0
        %746 = vmatprep.subr.bf16.mxu0 0
        %747 = vmatpush1.bf16.msra.mxu0 0
        %748 = vmatprep.subr.bf16.mxu0 0
        %749 = vmatpush1.bf16.msra.mxu0 0
        %750 = vmatprep.subr.bf16.mxu0 0
        %751 = vmatpush1.bf16.msra.mxu0 0
        %752 = vmatprep.subr.bf16.mxu0 0
        %753 = vmatpush1.bf16.msra.mxu0 0
        %754 = vmatprep.subr.bf16.mxu0 0
        %755 = vmatpush1.bf16.msra.mxu0 0
        %756 = vmatprep.mubr.bf16.mxu0 0
        %757 = vmatmul.mubr.bf16.gmra.mrb[0].mxu0 %v722
        %v758 = vpop.f32.mrb[0].mxu0
        %v759 = vadd.f32 0.0, %v758
        %v760 = vpop.f32.mrb[0].mxu0
        %v761 = vpop.f32.mrb[0].mxu0
        %v762 = vpop.f32.mrb[0].mxu0
        %763 = vdwg.mxu0
        %v764 = vadd.f32 %v703, %v759
        %765 = vst [vmem:[#allocation2] sm:$0xff] %v764
        %p766 = scmp.eq.s32.totalorder %s28, 1
        // Predicated region
        $region61: #{tpu_custom_call.1} parent=51 // pred_check
          %p767 = pneg %p766
        $region62: #{tpu_custom_call.1} parent=51 // pred_check_branch
          %769 = sbr.rel (%p767) target = $region64
        $region63: #{tpu_custom_call.1} parent=51 // pred_region
          %v770 = vld [vmem:[#allocation2] sm:$0xff]
          %771 = vst [vmem:[%s362] sm:$0xff] %v770
        $region64: #{tpu_custom_call.1} parent=51 // pred_fallthru
          _
        %s772 = sand.u32 %s229, 1
        %s773 = scalar_lea.sflag [#allocation5], %s772
        %s774 = sand.u32 %s229, 1
        %s775 = smul.addr %s774, 8
        %s776 = scalar_lea.vmem [#allocation6], %s775
        // Predicated region
        $region65: #{tpu_custom_call.1} parent=51 // pred_check
          %p777 = pneg %p239
        $region66: #{tpu_custom_call.1} parent=51 // pred_check_branch
          %779 = sbr.rel (%p777) target = $region68
        $region67: #{tpu_custom_call.1} parent=51 // pred_region
          %s781 = ssub.s32 128, 128
          %782 = vsyncadd %s773, %s781
          %s783 = smul.addr %s27, 128
          %s784 = scalar_lea.hbm %s8, %s783
          %s786 = sshll.u32 %s776, 4
          %s787 = int_to_ptr.vmem [resolvable:$true] %s786
          %789 = dma.vmem_to_hbm [thread:$0]  %s787, 128, %s784, %s773
        $region68: #{tpu_custom_call.1} parent=51 // pred_fallthru
          _
      $region52: #{tpu_custom_call.1} parent=5 // pred_fallthru
        _
      %p790 = scmp.le.s32.totalorder 2, %s18
      // Predicated region
      $region69: #{tpu_custom_call.1} parent=5 // pred_check
        %p791 = pneg %p790
      $region70: #{tpu_custom_call.1} parent=5 // pred_check_branch
        %793 = sbr.rel (%p791) target = $region72
      $region71: #{tpu_custom_call.1} parent=5 // pred_region
        %s794 = ssub.s32 %s18, 2
        // Predicated region
        $region73: #{tpu_custom_call.1} parent=71 // pred_check
          %p795 = pneg %p245
        $region74: #{tpu_custom_call.1} parent=71 // pred_check_branch
          %797 = sbr.rel (%p795) target = $region76
        $region75: #{tpu_custom_call.1} parent=71 // pred_region
          %s798 = sand.u32 %s230, 1
          %s799 = scalar_lea.sflag [#allocation5], %s798
          %s800 = sand.u32 %s230, 1
          %s801 = smul.addr %s800, 8
          %s802 = scalar_lea.vmem [#allocation6], %s801
          %803 = dma.done %s799, 128
        $region76: #{tpu_custom_call.1} parent=71 // pred_fallthru
          _
      $region72: #{tpu_custom_call.1} parent=5 // pred_fallthru
        _
    $region6: #{tpu_custom_call.1} parent=1 // loop_footer
      %s22 = sadd.s32 1, %s18
    $region7: #{tpu_custom_call.1} parent=1 // loop_footer_branch
      %17 = sbr.rel target = $region3
    $region8: #{tpu_custom_call.1} parent=1 // loop_exit
      _
    %804 = vsyncpa [#allocation4], 1
    %s805 = scalar_lea.sflag [#allocation4], 1
    %806 = vsyncpa %s805, 1
    %807 = vsyncpa [#allocation5], 1
    %s808 = scalar_lea.sflag [#allocation5], 1
    %809 = vsyncpa %s808, 1

</llo_original>
